<compile_context>
chip_gen: v5e
topology: v5e:2x2
jax: 0.10.0
libtpu: 0.0.40
codegen_flags: <defaults>
</compile_context>

<pallas_src>
import jax
import jax.numpy as jnp
from jax.experimental import pallas as pl
from jax.experimental.pallas import tpu as pltpu


# ----------------------------- Pallas kernel --------------------------------
def _detector_heads_kernel(x_ref, w_ref, b_ref, o_ref):
    """Fused reg/obj/cls heads for both scales and the whole batch.

    x_ref : (3*Cin, L)    bf16   activations, heads stacked along Cin,
                                 batch+both scales folded into lanes.
    w_ref : (Ctot, 3*Cin) bf16   block-diagonal head weights.
    b_ref : (Ctot, 1)     f32    concatenated biases.
    o_ref : (Ctot, L)     f32    packed outputs (rows: reg | obj | cls).
    """
    acc = jnp.dot(w_ref[...], x_ref[...],
                  preferred_element_type=jnp.float32)        # (Ctot, L) f32
    o_ref[...] = (acc + b_ref[...]).astype(o_ref.dtype)


def _pack_head(x2, x3):
    """[N,Cin,H2,W2] + [N,Cin,H3,W3] -> (Cin, N*(H2W2+H3W3)) lane-dense slab."""
    N, Cin, H2, W2 = x2.shape
    _, _, H3, W3 = x3.shape
    a = x2.reshape(N, Cin, H2 * W2).transpose(1, 0, 2).reshape(Cin, N * H2 * W2)
    b = x3.reshape(N, Cin, H3 * W3).transpose(1, 0, 2).reshape(Cin, N * H3 * W3)
    return jnp.concatenate([a, b], axis=1)


def detector_heads_fused(reg_2, obj_2, cls_2, reg_3, obj_3, cls_3,
                         w_block_bf16, bias_f32, Cr, Co, Cc):
    """Apply the three shared 1x1-conv heads to both FPN scales in one launch.

    Returns (out_reg_2, out_obj_2, out_cls_2, out_reg_3, out_obj_3, out_cls_3)
    in NCHW, float32.
    """
    N, Cin, H2, W2 = reg_2.shape
    _, _, H3, W3 = reg_3.shape
    HW2, HW3 = H2 * W2, H3 * W3
    L = N * (HW2 + HW3)
    Ctot = Cr + Co + Cc
    K = 3 * Cin

    # Lane-dense packed activations (heads along Cin, batch+scales along lanes).
    x = jnp.concatenate(
        [_pack_head(reg_2, reg_3),
         _pack_head(obj_2, obj_3),
         _pack_head(cls_2, cls_3)], axis=0).astype(jnp.bfloat16)   # (K, L)

    flops = 2 * Ctot * K * L
    bytes_accessed = (2 * K * L          # bf16 activations
                      + 2 * Ctot * K     # bf16 block-diag weight
                      + 4 * Ctot         # f32 bias
                      + 4 * Ctot * L)    # f32 output

    out = pl.pallas_call(
        _detector_heads_kernel,
        out_shape=jax.ShapeDtypeStruct((Ctot, L), jnp.float32),
        grid_spec=pltpu.PrefetchScalarGridSpec(
            num_scalar_prefetch=0,
            grid=(1,),
            in_specs=[
                pl.BlockSpec((K, L), lambda i: (0, 0)),
                pl.BlockSpec((Ctot, K), lambda i: (0, 0)),
                pl.BlockSpec((Ctot, 1), lambda i: (0, 0)),
            ],
            out_specs=pl.BlockSpec((Ctot, L), lambda i: (0, 0)),
        ),
        compiler_params=pltpu.CompilerParams(
            dimension_semantics=("arbitrary",),
        ),
        cost_estimate=pl.CostEstimate(
            flops=flops, transcendentals=0, bytes_accessed=bytes_accessed),
    )(x, w_block_bf16, bias_f32)

    # Un-pack: split lanes into scales, rows into heads (free XLA reshapes).
    o2 = out[:, :N * HW2].reshape(Ctot, N, H2, W2).transpose(1, 0, 2, 3)
    o3 = out[:, N * HW2:].reshape(Ctot, N, H3, W3).transpose(1, 0, 2, 3)
    return (o2[:, :Cr], o2[:, Cr:Cr + Co], o2[:, Cr + Co:],
            o3[:, :Cr], o3[:, Cr:Cr + Co], o3[:, Cr + Co:])


# ------------------------------ Detector head -------------------------------
class DetectorHead:
    """Pallas implementation of Detector's head convolutions.

    Equivalent to:
        self.output_reg_layers = nn.Conv2d(out_depth, 4*anchor_num, 1, 1, 0, bias=True)
        self.output_obj_layers = nn.Conv2d(out_depth, anchor_num,   1, 1, 0, bias=True)
        self.output_cls_layers = nn.Conv2d(out_depth, classes,      1, 1, 0, bias=True)
    The same three convs are applied to both FPN scales (weight sharing), as in
    the PyTorch forward (export_onnx=False branch).
    """

    def __init__(self, classes, anchor_num, out_depth=72, key=None,
                 dtype=jnp.float32):
        if key is None:
            key = jax.random.PRNGKey(0)
        k = jax.random.split(key, 6)

        self.Cin = out_depth
        self.Cr = 4 * anchor_num
        self.Co = anchor_num
        self.Cc = classes
        Ctot = self.Cr + self.Co + self.Cc

        # PyTorch weights have shape [Cout, Cin, 1, 1]; we keep them as
        # [Cout, Cin] (matmul-LHS orientation, no runtime transpose).
        def _w(kk, cin, cout):
            bound = 1.0 / jnp.sqrt(cin)
            return jax.random.uniform(kk, (cout, cin), dtype, -bound, bound)

        def _b(kk, cin, cout):
            bound = 1.0 / jnp.sqrt(cin)
            return jax.random.uniform(kk, (cout,), dtype, -bound, bound)

        self.wt_reg = _w(k[0], out_depth, self.Cr)
        self.b_reg = _b(k[1], out_depth, self.Cr)
        self.wt_obj = _w(k[2], out_depth, self.Co)
        self.b_obj = _b(k[3], out_depth, self.Co)
        self.wt_cls = _w(k[4], out_depth, self.Cc)
        self.b_cls = _b(k[5], out_depth, self.Cc)

        # Block-diagonal fused weight (built once): one MXU pass per call.
        wb = jnp.zeros((Ctot, 3 * out_depth), dtype)
        wb = wb.at[:self.Cr, :out_depth].set(self.wt_reg)
        wb = wb.at[self.Cr:self.Cr + self.Co,
                   out_depth:2 * out_depth].set(self.wt_obj)
        wb = wb.at[self.Cr + self.Co:, 2 * out_depth:].set(self.wt_cls)
        self.w_block = wb.astype(jnp.bfloat16)
        self.bias = jnp.concatenate(
            [self.b_reg, self.b_obj, self.b_cls]).reshape(Ctot, 1).astype(
                jnp.float32)

    def __call__(self, cls_2, obj_2, reg_2, cls_3, obj_3, reg_3):
        return detector_heads_fused(
            reg_2, obj_2, cls_2, reg_3, obj_3, cls_3,
            self.w_block, self.bias, self.Cr, self.Co, self.Cc)


# ---------------------------------- main -------------------------------------
if __name__ == "__main__":
    classes = 4
    anchor_num = 3
    out_depth = 72          # matches the module's out_depth for default backbones
    N = 2
    H2 = W2 = 16            # FPN scale-2 feature map
    H3 = W3 = 8             # FPN scale-3 feature map

    key = jax.random.PRNGKey(0)
    kf = jax.random.split(key, 7)

    # Synthetic FPN outputs (what LightFPN would produce), NCHW float32.
    cls_2 = jax.random.normal(kf[0], (N, out_depth, H2, W2), jnp.float32)
    obj_2 = jax.random.normal(kf[1], (N, out_depth, H2, W2), jnp.float32)
    reg_2 = jax.random.normal(kf[2], (N, out_depth, H2, W2), jnp.float32)
    cls_3 = jax.random.normal(kf[3], (N, out_depth, H3, W3), jnp.float32)
    obj_3 = jax.random.normal(kf[4], (N, out_depth, H3, W3), jnp.float32)
    reg_3 = jax.random.normal(kf[5], (N, out_depth, H3, W3), jnp.float32)

    head = DetectorHead(classes, anchor_num, out_depth, key=kf[6])

    outs = jax.jit(head.__call__)(cls_2, obj_2, reg_2, cls_3, obj_3, reg_3)
    outs = jax.block_until_ready(outs)

    # Reference: plain-JAX 1x1 conv (NCHW, bias) on the SAME bf16-rounded
    # activations/weights, exact (HIGHEST precision) f32 accumulation.
    def ref_conv(x, wt, b):
        xb = x.astype(jnp.bfloat16).astype(jnp.float32)
        wb = wt.astype(jnp.bfloat16).astype(jnp.float32)
        y = jnp.einsum("nchw,dc->ndhw", xb, wb, precision="highest")
        return y + b[None, :, None, None]

    ref = (
        ref_conv(reg_2, head.wt_reg, head.b_reg),
        ref_conv(obj_2, head.wt_obj, head.b_obj),
        ref_conv(cls_2, head.wt_cls, head.b_cls),
        ref_conv(reg_3, head.wt_reg, head.b_reg),
        ref_conv(obj_3, head.wt_obj, head.b_obj),
        ref_conv(cls_3, head.wt_cls, head.b_cls),
    )
    expected_shapes = [
        (N, 4 * anchor_num, H2, W2), (N, anchor_num, H2, W2), (N, classes, H2, W2),
        (N, 4 * anchor_num, H3, W3), (N, anchor_num, H3, W3), (N, classes, H3, W3),
    ]
    for o, r, s in zip(outs, ref, expected_shapes):
        assert o.shape == s, (o.shape, s)
        assert jnp.allclose(o, r, atol=2e-3, rtol=2e-3), float(
            jnp.max(jnp.abs(o - r)))

    print("KERNEL_OK")
</pallas_src>

<mosaic_0001>
module attributes {stable_mosaic.version = 11 : i64} {
  func.func @_detector_heads_kernel(%arg0: i32, %arg1: memref<216x640xbf16, #tpu.memory_space<vmem>>, %arg2: memref<19x216xbf16, #tpu.memory_space<vmem>>, %arg3: memref<19x1xf32, #tpu.memory_space<vmem>>, %arg4: memref<19x640xf32, #tpu.memory_space<vmem>>) attributes {dimension_semantics = [#tpu.dimension_semantics<arbitrary>], iteration_bounds = array<i64: 1>, scalar_prefetch = 0 : i64, scratch_operands = 0 : i64, tpu.core_type = #tpu.core_type<tc>, window_params = [{pipeline_mode = #tpu.pipeline_mode<synchronous>, transform_indices = @transform_0, window_bounds = array<i64: 216, 640>}, {pipeline_mode = #tpu.pipeline_mode<synchronous>, transform_indices = @transform_1, window_bounds = array<i64: 19, 216>}, {pipeline_mode = #tpu.pipeline_mode<synchronous>, transform_indices = @transform_2, window_bounds = array<i64: 19, 1>}, {pipeline_mode = #tpu.pipeline_mode<synchronous>, transform_indices = @transform_3, window_bounds = array<i64: 19, 640>}]} {
    %c0 = arith.constant 0 : index
    %c0_0 = arith.constant 0 : index
    %0 = vector.load %arg2[%c0, %c0_0] : memref<19x216xbf16, #tpu.memory_space<vmem>>, vector<19x216xbf16>
    %c0_1 = arith.constant 0 : index
    %c0_2 = arith.constant 0 : index
    %1 = vector.load %arg1[%c0_1, %c0_2] : memref<216x640xbf16, #tpu.memory_space<vmem>>, vector<216x640xbf16>
    %cst = arith.constant dense<0.000000e+00> : vector<19x640xf32>
    %2 = tpu.matmul %0, %1, %cst {dimension_numbers = #tpu.dot_dimension_numbers<[1], [0], [0], [1], [0, 0, 1, 1], [], []>} : vector<19x216xbf16>, vector<216x640xbf16>, vector<19x640xf32> -> vector<19x640xf32>
    %c0_3 = arith.constant 0 : index
    %c0_4 = arith.constant 0 : index
    %3 = vector.load %arg3[%c0_3, %c0_4] : memref<19x1xf32, #tpu.memory_space<vmem>>, vector<19x1xf32>
    %4 = vector.broadcast %3 : vector<19x1xf32> to vector<19x640xf32>
    %5 = arith.addf %2, %4 : vector<19x640xf32>
    %c0_5 = arith.constant 0 : index
    %c0_6 = arith.constant 0 : index
    %6 = vector.load %arg4[%c0_5, %c0_6] : memref<19x640xf32, #tpu.memory_space<vmem>>, vector<19x640xf32>
    tpu.vector_store %arg4[%c0_5, %c0_6], %5 {strides = array<i32>} : memref<19x640xf32, #tpu.memory_space<vmem>>, vector<19x640xf32>,
    return
  }
  func.func @transform_0(%arg0: i32) -> (i32, i32) {
    %c0_i32 = arith.constant 0 : i32
    %c0_i32_0 = arith.constant 0 : i32
    %c0_i32_1 = arith.constant 0 : i32
    return %c0_i32, %c0_i32_0 : i32, i32
  }
  func.func @transform_1(%arg0: i32) -> (i32, i32) {
    %c0_i32 = arith.constant 0 : i32
    %c0_i32_0 = arith.constant 0 : i32
    %c0_i32_1 = arith.constant 0 : i32
    return %c0_i32, %c0_i32_0 : i32, i32
  }
  func.func @transform_2(%arg0: i32) -> (i32, i32) {
    %c0_i32 = arith.constant 0 : i32
    %c0_i32_0 = arith.constant 0 : i32
    %c0_i32_1 = arith.constant 0 : i32
    return %c0_i32, %c0_i32_0 : i32, i32
  }
  func.func @transform_3(%arg0: i32) -> (i32, i32) {
    %c0_i32 = arith.constant 0 : i32
    %c0_i32_0 = arith.constant 0 : i32
    %c0_i32_1 = arith.constant 0 : i32
    return %c0_i32, %c0_i32_0 : i32, i32
  }
}

</mosaic_0001>

<llo_original>
// kernel: a_call__.1
$region0: #{a_call__.1}
  #allocation0 [shape = 'u32[]', space=smem, size = 0x4, offset = 0x4, fixed_abs, tag = 'smem constant byte address 0x4 - core index']
  #allocation1 [shape = 'u32[72,128]{1,0:T(1,128)}', space=vmem, size = 0x9000, scoped, tag = 'internal scratch']
  %s0 = inlined_call_operand.vmem [shape: bf16[216,640], index: 0, kind: input, shape index: {}]
  %s1 = inlined_call_operand.vmem [shape: bf16[19,216], index: 1, kind: input, shape index: {}]
  %s2 = inlined_call_operand.vmem [shape: f32[19,1], index: 2, kind: input, shape index: {}]
  %s3 = inlined_call_operand.vmem [shape: f32[19,640], index: 3, kind: output, shape index: {}]
  %s4 = sld [smem:[#allocation0]]
  $region22: #{a_call__.1} parent=0
    _
  %s6 = ssub.s32 1, %s4
  %s7 = scalar_select 0, %s6, %s4
  // Predicated region
  $region2: #{a_call__.1} parent=0 // pred_check
    _
  $region3: #{a_call__.1} parent=0 // pred_check_branch
    %9 = sbr.rel (0) target = $region5
  $region4: #{a_call__.1} parent=0 // pred_region
    _
  $region5: #{a_call__.1} parent=0 // pred_fallthru
    _
  // Predicated region
  $region6: #{a_call__.1} parent=0 // pred_check
    _
  $region7: #{a_call__.1} parent=0 // pred_check_branch
    %11 = sbr.rel (0) target = $region9
  $region8: #{a_call__.1} parent=0 // pred_region
    _
  $region9: #{a_call__.1} parent=0 // pred_fallthru
    _
  // Predicated region
  $region10: #{a_call__.1} parent=0 // pred_check
    _
  $region11: #{a_call__.1} parent=0 // pred_check_branch
    %13 = sbr.rel (0) target = $region13
  $region12: #{a_call__.1} parent=0 // pred_region
    _
  $region13: #{a_call__.1} parent=0 // pred_fallthru
    _
  %v15 = vld [vmem:[%s1] sm:$0xff]
  %v16 = vld [vmem:[%s1 + $0x8] sm:$0xff]
  %v17 = vld [vmem:[%s1 + $0x10] sm:$0x33]
  %v18 = vld [vmem:[%s0] sm:$0xff]
  %v19 = vld [vmem:[%s0 + $0x8] sm:$0xff]
  %v20 = vld [vmem:[%s0 + $0x10] sm:$0xf]
  %v21 = vld [vmem:[%s0 + $0x14] sm:$0xff]
  %v22 = vld [vmem:[%s0 + $0x1c] sm:$0xff]
  %v23 = vld [vmem:[%s0 + $0x24] sm:$0xf]
  %v24 = vld [vmem:[%s0 + $0x28] sm:$0xff]
  %v25 = vld [vmem:[%s0 + $0x30] sm:$0xff]
  %v26 = vld [vmem:[%s0 + $0x38] sm:$0xf]
  %v27 = vld [vmem:[%s0 + $0x3c] sm:$0xff]
  %v28 = vld [vmem:[%s0 + $0x44] sm:$0xff]
  %v29 = vld [vmem:[%s0 + $0x4c] sm:$0xf]
  %v30 = vld [vmem:[%s0 + $0x50] sm:$0xff]
  %v31 = vld [vmem:[%s0 + $0x58] sm:$0xff]
  %v32 = vld [vmem:[%s0 + $0x60] sm:$0xf]
  %v33 = vld [vmem:[%s0 + $0x64] sm:$0xff]
  %v34 = vld [vmem:[%s0 + $0x6c] sm:$0xff]
  %v35 = vld [vmem:[%s0 + $0x74] sm:$0xf]
  %v36 = vld [vmem:[%s0 + $0x78] sm:$0xff]
  %v37 = vld [vmem:[%s0 + $0x80] sm:$0xff]
  %v38 = vld [vmem:[%s0 + $0x88] sm:$0xf]
  %v39 = vld [vmem:[%s0 + $0x8c] sm:$0xff]
  %v40 = vld [vmem:[%s0 + $0x94] sm:$0xff]
  %v41 = vld [vmem:[%s0 + $0x9c] sm:$0xf]
  %v42 = vld [vmem:[%s0 + $0xa0] sm:$0xff]
  %v43 = vld [vmem:[%s0 + $0xa8] sm:$0xff]
  %v44 = vld [vmem:[%s0 + $0xb0] sm:$0xf]
  %v45 = vld [vmem:[%s0 + $0xb4] sm:$0xff]
  %v46 = vld [vmem:[%s0 + $0xbc] sm:$0xff]
  %v47 = vld [vmem:[%s0 + $0xc4] sm:$0xf]
  %v48 = vld [vmem:[%s0 + $0xc8] sm:$0xff]
  %v49 = vld [vmem:[%s0 + $0xd0] sm:$0xff]
  %v50 = vld [vmem:[%s0 + $0xd8] sm:$0xf]
  %v51 = vld [vmem:[%s0 + $0xdc] sm:$0xff]
  %v52 = vld [vmem:[%s0 + $0xe4] sm:$0xff]
  %v53 = vld [vmem:[%s0 + $0xec] sm:$0xf]
  %v54 = vld [vmem:[%s0 + $0xf0] sm:$0xff]
  %v55 = vld [vmem:[%s0 + $0xf8] sm:$0xff]
  %v56 = vld [vmem:[%s0 + $0x100] sm:$0xf]
  %v57 = vld [vmem:[%s0 + $0x104] sm:$0xff]
  %v58 = vld [vmem:[%s0 + $0x10c] sm:$0xff]
  %v59 = vld [vmem:[%s0 + $0x114] sm:$0xf]
  %v60 = vld [vmem:[%s0 + $0x118] sm:$0xff]
  %v61 = vld [vmem:[%s0 + $0x120] sm:$0xff]
  %v62 = vld [vmem:[%s0 + $0x128] sm:$0xf]
  %v63 = vld [vmem:[%s0 + $0x12c] sm:$0xff]
  %v64 = vld [vmem:[%s0 + $0x134] sm:$0xff]
  %v65 = vld [vmem:[%s0 + $0x13c] sm:$0xf]
  %v66 = vld [vmem:[%s0 + $0x140] sm:$0xff]
  %v67 = vld [vmem:[%s0 + $0x148] sm:$0xff]
  %v68 = vld [vmem:[%s0 + $0x150] sm:$0xf]
  %v69 = vld [vmem:[%s0 + $0x154] sm:$0xff]
  %v70 = vld [vmem:[%s0 + $0x15c] sm:$0xff]
  %v71 = vld [vmem:[%s0 + $0x164] sm:$0xf]
  %v72 = vld [vmem:[%s0 + $0x168] sm:$0xff]
  %v73 = vld [vmem:[%s0 + $0x170] sm:$0xff]
  %v74 = vld [vmem:[%s0 + $0x178] sm:$0xf]
  %v75 = vld [vmem:[%s0 + $0x17c] sm:$0xff]
  %v76 = vld [vmem:[%s0 + $0x184] sm:$0xff]
  %v77 = vld [vmem:[%s0 + $0x18c] sm:$0xf]
  %v78 = vld [vmem:[%s0 + $0x190] sm:$0xff]
  %v79 = vld [vmem:[%s0 + $0x198] sm:$0xff]
  %v80 = vld [vmem:[%s0 + $0x1a0] sm:$0xf]
  %v81 = vld [vmem:[%s0 + $0x1a4] sm:$0xff]
  %v82 = vld [vmem:[%s0 + $0x1ac] sm:$0xff]
  %v83 = vld [vmem:[%s0 + $0x1b4] sm:$0xf]
  %v84 = vld [vmem:[%s0 + $0x1b8] sm:$0xff]
  %v85 = vld [vmem:[%s0 + $0x1c0] sm:$0xff]
  %v86 = vld [vmem:[%s0 + $0x1c8] sm:$0xf]
  %v87 = vld [vmem:[%s0 + $0x1cc] sm:$0xff]
  %v88 = vld [vmem:[%s0 + $0x1d4] sm:$0xff]
  %v89 = vld [vmem:[%s0 + $0x1dc] sm:$0xf]
  %v90 = vld [vmem:[%s0 + $0x1e0] sm:$0xff]
  %v91 = vld [vmem:[%s0 + $0x1e8] sm:$0xff]
  %v92 = vld [vmem:[%s0 + $0x1f0] sm:$0xf]
  %v93 = vld [vmem:[%s0 + $0x1f4] sm:$0xff]
  %v94 = vld [vmem:[%s0 + $0x1fc] sm:$0xff]
  %v95 = vld [vmem:[%s0 + $0x204] sm:$0xf]
  %v96 = vld [vmem:[%s0 + $0x208] sm:$0xff]
  %v97 = vld [vmem:[%s0 + $0x210] sm:$0xff]
  %v98 = vld [vmem:[%s0 + $0x218] sm:$0xf]
  %v99 = vld [vmem:[%s2] sm:$0xff]
  %v100 = vld [vmem:[%s2 + $0x8] sm:$0xff]
  %v101 = vld [vmem:[%s2 + $0x10] sm:$0x7]
  %103 = vset.pattern.permute.xlu0 0
  %104 = vperm.xlu0 %103, %v99
  %v105 = vpop.permute.xlu0 %104
  %108 = vset.pattern.permute.xlu0 0
  %109 = vperm.xlu0 %108, %v100
  %v110 = vpop.permute.xlu0 %109
  %113 = vset.pattern.permute.xlu0 0
  %114 = vperm.xlu0 %113, %v101
  %v115 = vpop.permute.xlu0 %114
  %v120 = vunpack.c.l.b16 %v15
  %v121 = vunpack.c.h.b16 %v15
  %v122 = vunpack.c.l.b16 %v16
  %v123 = vunpack.c.h.b16 %v16
  %v124 = vunpack.c.l.b16 %v17
  %v125 = vunpack.c.h.b16 %v17
  %v126 = vpack.c.b16 %v122, %v120
  %v127 = vpack.c.b16 %v123, %v121
  %v128 = vpack.c.b16 %v124, %v124
  %v129 = vpack.c.b16 %v125, %v125
  %v213 = vunpack.c.l.b16 %v18
  %v214 = vunpack.c.h.b16 %v18
  %v215 = vunpack.c.l.b16 %v19
  %v216 = vunpack.c.h.b16 %v19
  %v217 = vunpack.c.l.b16 %v20
  %v218 = vunpack.c.l.b16 %v21
  %v219 = vunpack.c.h.b16 %v21
  %v220 = vunpack.c.l.b16 %v22
  %v221 = vunpack.c.h.b16 %v22
  %v222 = vunpack.c.l.b16 %v23
  %v223 = vunpack.c.l.b16 %v24
  %v224 = vunpack.c.h.b16 %v24
  %v225 = vunpack.c.l.b16 %v25
  %v226 = vunpack.c.h.b16 %v25
  %v227 = vunpack.c.l.b16 %v26
  %v228 = vunpack.c.l.b16 %v27
  %v229 = vunpack.c.h.b16 %v27
  %v230 = vunpack.c.l.b16 %v28
  %v231 = vunpack.c.h.b16 %v28
  %v232 = vunpack.c.l.b16 %v29
  %v233 = vunpack.c.l.b16 %v30
  %v234 = vunpack.c.h.b16 %v30
  %v235 = vunpack.c.l.b16 %v31
  %v236 = vunpack.c.h.b16 %v31
  %v237 = vunpack.c.l.b16 %v32
  %v238 = vunpack.c.l.b16 %v33
  %v239 = vunpack.c.h.b16 %v33
  %v240 = vunpack.c.l.b16 %v34
  %v241 = vunpack.c.h.b16 %v34
  %v242 = vunpack.c.l.b16 %v35
  %v243 = vunpack.c.l.b16 %v36
  %v244 = vunpack.c.h.b16 %v36
  %v245 = vunpack.c.l.b16 %v37
  %v246 = vunpack.c.h.b16 %v37
  %v247 = vunpack.c.l.b16 %v38
  %v248 = vunpack.c.l.b16 %v39
  %v249 = vunpack.c.h.b16 %v39
  %v250 = vunpack.c.l.b16 %v40
  %v251 = vunpack.c.h.b16 %v40
  %v252 = vunpack.c.l.b16 %v41
  %v253 = vunpack.c.l.b16 %v42
  %v254 = vunpack.c.h.b16 %v42
  %v255 = vunpack.c.l.b16 %v43
  %v256 = vunpack.c.h.b16 %v43
  %v257 = vunpack.c.l.b16 %v44
  %v258 = vunpack.c.l.b16 %v45
  %v259 = vunpack.c.h.b16 %v45
  %v260 = vunpack.c.l.b16 %v46
  %v261 = vunpack.c.h.b16 %v46
  %v262 = vunpack.c.l.b16 %v47
  %v263 = vunpack.c.l.b16 %v48
  %v264 = vunpack.c.h.b16 %v48
  %v265 = vunpack.c.l.b16 %v49
  %v266 = vunpack.c.h.b16 %v49
  %v267 = vunpack.c.l.b16 %v50
  %v268 = vunpack.c.l.b16 %v51
  %v269 = vunpack.c.h.b16 %v51
  %v270 = vunpack.c.l.b16 %v52
  %v271 = vunpack.c.h.b16 %v52
  %v272 = vunpack.c.l.b16 %v53
  %v273 = vunpack.c.l.b16 %v54
  %v274 = vunpack.c.h.b16 %v54
  %v275 = vunpack.c.l.b16 %v55
  %v276 = vunpack.c.h.b16 %v55
  %v277 = vunpack.c.l.b16 %v56
  %v278 = vunpack.c.l.b16 %v57
  %v279 = vunpack.c.h.b16 %v57
  %v280 = vunpack.c.l.b16 %v58
  %v281 = vunpack.c.h.b16 %v58
  %v282 = vunpack.c.l.b16 %v59
  %v283 = vunpack.c.l.b16 %v60
  %v284 = vunpack.c.h.b16 %v60
  %v285 = vunpack.c.l.b16 %v61
  %v286 = vunpack.c.h.b16 %v61
  %v287 = vunpack.c.l.b16 %v62
  %v288 = vunpack.c.l.b16 %v63
  %v289 = vunpack.c.h.b16 %v63
  %v290 = vunpack.c.l.b16 %v64
  %v291 = vunpack.c.h.b16 %v64
  %v292 = vunpack.c.l.b16 %v65
  %v293 = vunpack.c.l.b16 %v66
  %v294 = vunpack.c.h.b16 %v66
  %v295 = vunpack.c.l.b16 %v67
  %v296 = vunpack.c.h.b16 %v67
  %v297 = vunpack.c.l.b16 %v68
  %v298 = vunpack.c.l.b16 %v69
  %v299 = vunpack.c.h.b16 %v69
  %v300 = vunpack.c.l.b16 %v70
  %v301 = vunpack.c.h.b16 %v70
  %v302 = vunpack.c.l.b16 %v71
  %v303 = vunpack.c.l.b16 %v72
  %v304 = vunpack.c.h.b16 %v72
  %v305 = vunpack.c.l.b16 %v73
  %v306 = vunpack.c.h.b16 %v73
  %v307 = vunpack.c.l.b16 %v74
  %v308 = vunpack.c.l.b16 %v75
  %v309 = vunpack.c.h.b16 %v75
  %v310 = vunpack.c.l.b16 %v76
  %v311 = vunpack.c.h.b16 %v76
  %v312 = vunpack.c.l.b16 %v77
  %v313 = vunpack.c.l.b16 %v78
  %v314 = vunpack.c.h.b16 %v78
  %v315 = vunpack.c.l.b16 %v79
  %v316 = vunpack.c.h.b16 %v79
  %v317 = vunpack.c.l.b16 %v80
  %v318 = vunpack.c.l.b16 %v81
  %v319 = vunpack.c.h.b16 %v81
  %v320 = vunpack.c.l.b16 %v82
  %v321 = vunpack.c.h.b16 %v82
  %v322 = vunpack.c.l.b16 %v83
  %v323 = vunpack.c.l.b16 %v84
  %v324 = vunpack.c.h.b16 %v84
  %v325 = vunpack.c.l.b16 %v85
  %v326 = vunpack.c.h.b16 %v85
  %v327 = vunpack.c.l.b16 %v86
  %v328 = vunpack.c.l.b16 %v87
  %v329 = vunpack.c.h.b16 %v87
  %v330 = vunpack.c.l.b16 %v88
  %v331 = vunpack.c.h.b16 %v88
  %v332 = vunpack.c.l.b16 %v89
  %v333 = vunpack.c.l.b16 %v90
  %v334 = vunpack.c.h.b16 %v90
  %v335 = vunpack.c.l.b16 %v91
  %v336 = vunpack.c.h.b16 %v91
  %v337 = vunpack.c.l.b16 %v92
  %v338 = vunpack.c.l.b16 %v93
  %v339 = vunpack.c.h.b16 %v93
  %v340 = vunpack.c.l.b16 %v94
  %v341 = vunpack.c.h.b16 %v94
  %v342 = vunpack.c.l.b16 %v95
  %v343 = vunpack.c.l.b16 %v96
  %v344 = vunpack.c.h.b16 %v96
  %v345 = vunpack.c.l.b16 %v97
  %v346 = vunpack.c.h.b16 %v97
  %v347 = vunpack.c.l.b16 %v98
  %v348 = vpack.c.b16 %v218, %v213
  %v349 = vpack.c.b16 %v219, %v214
  %v350 = vpack.c.b16 %v220, %v215
  %v351 = vpack.c.b16 %v221, %v216
  %v352 = vpack.c.b16 %v222, %v217
  %v353 = vpack.c.b16 %v228, %v223
  %v354 = vpack.c.b16 %v229, %v224
  %v355 = vpack.c.b16 %v230, %v225
  %v356 = vpack.c.b16 %v231, %v226
  %v357 = vpack.c.b16 %v232, %v227
  %v358 = vpack.c.b16 %v238, %v233
  %v359 = vpack.c.b16 %v239, %v234
  %v360 = vpack.c.b16 %v240, %v235
  %v361 = vpack.c.b16 %v241, %v236
  %v362 = vpack.c.b16 %v242, %v237
  %v363 = vpack.c.b16 %v248, %v243
  %v364 = vpack.c.b16 %v249, %v244
  %v365 = vpack.c.b16 %v250, %v245
  %v366 = vpack.c.b16 %v251, %v246
  %v367 = vpack.c.b16 %v252, %v247
  %v368 = vpack.c.b16 %v258, %v253
  %v369 = vpack.c.b16 %v259, %v254
  %v370 = vpack.c.b16 %v260, %v255
  %v371 = vpack.c.b16 %v261, %v256
  %v372 = vpack.c.b16 %v262, %v257
  %v373 = vpack.c.b16 %v268, %v263
  %v374 = vpack.c.b16 %v269, %v264
  %v375 = vpack.c.b16 %v270, %v265
  %v376 = vpack.c.b16 %v271, %v266
  %v377 = vpack.c.b16 %v272, %v267
  %v378 = vpack.c.b16 %v278, %v273
  %v379 = vpack.c.b16 %v279, %v274
  %v380 = vpack.c.b16 %v280, %v275
  %v381 = vpack.c.b16 %v281, %v276
  %v382 = vpack.c.b16 %v282, %v277
  %v383 = vpack.c.b16 %v288, %v283
  %v384 = vpack.c.b16 %v289, %v284
  %v385 = vpack.c.b16 %v290, %v285
  %v386 = vpack.c.b16 %v291, %v286
  %v387 = vpack.c.b16 %v292, %v287
  %v388 = vpack.c.b16 %v298, %v293
  %v389 = vpack.c.b16 %v299, %v294
  %v390 = vpack.c.b16 %v300, %v295
  %v391 = vpack.c.b16 %v301, %v296
  %v392 = vpack.c.b16 %v302, %v297
  %v393 = vpack.c.b16 %v308, %v303
  %v394 = vpack.c.b16 %v309, %v304
  %v395 = vpack.c.b16 %v310, %v305
  %v396 = vpack.c.b16 %v311, %v306
  %v397 = vpack.c.b16 %v312, %v307
  %v398 = vpack.c.b16 %v318, %v313
  %v399 = vpack.c.b16 %v319, %v314
  %v400 = vpack.c.b16 %v320, %v315
  %v401 = vpack.c.b16 %v321, %v316
  %v402 = vpack.c.b16 %v322, %v317
  %v403 = vpack.c.b16 %v328, %v323
  %v404 = vpack.c.b16 %v329, %v324
  %v405 = vpack.c.b16 %v330, %v325
  %v406 = vpack.c.b16 %v331, %v326
  %v407 = vpack.c.b16 %v332, %v327
  %v408 = vpack.c.b16 %v338, %v333
  %v409 = vpack.c.b16 %v339, %v334
  %v410 = vpack.c.b16 %v340, %v335
  %v411 = vpack.c.b16 %v341, %v336
  %v412 = vpack.c.b16 %v342, %v337
  %v413 = vpack.c.b16 %v343, %v343
  %v414 = vpack.c.b16 %v344, %v344
  %v415 = vpack.c.b16 %v345, %v345
  %v416 = vpack.c.b16 %v346, %v346
  %v417 = vpack.c.b16 %v347, %v347
  %vm483 = vcmask 719872
  %v485 = vsel %vm483, %v127, 0
  %v488 = vsel %vm483, %v129, 0
  %vm490 = vcmask 1043456
  %v492 = vsel %vm490, %v413, 0
  %v495 = vsel %vm490, %v414, 0
  %v498 = vsel %vm490, %v415, 0
  %v501 = vsel %vm490, %v416, 0
  %v504 = vsel %vm490, %v417, 0
  %506 = vmatpush.bf16.msra.mxu0 %v383
  %507 = vmatpush.bf16.msra.mxu0 %v378
  %508 = vmatpush.bf16.msra.mxu0 %v373
  %509 = vmatpush.bf16.msra.mxu0 %v368
  %510 = vmatpush.bf16.msra.mxu0 %v363
  %511 = vmatpush.bf16.msra.mxu0 %v358
  %512 = vmatpush.bf16.msra.mxu0 %v353
  %513 = vmatpush.bf16.msra.mxu0 %v348
  %514 = vmatmul.bf16.gmra.mxu0 %v126
  %v515 = vpop.f32.mrf.mxu0
  %v516 = vadd.f32 %v105, %v515
  %v517 = vpop.f32.mrf.mxu0
  %v518 = vadd.f32 %v110, %v517
  %519 = vmatmul.bf16.gmra.mxu0 %v128
  %v520 = vpop.f32.mrf.mxu0
  %v521 = vadd.f32 %v115, %v520
  %v522 = vpop.f32.mrf.mxu0
  %523 = vdwg.mxu0
  %524 = vmatpush.bf16.msra.mxu0 0
  %525 = vmatpush.bf16.msra.mxu0 0
  %526 = vmatpush.bf16.msra.mxu0 %v492
  %527 = vmatpush.bf16.msra.mxu0 %v408
  %528 = vmatpush.bf16.msra.mxu0 %v403
  %529 = vmatpush.bf16.msra.mxu0 %v398
  %530 = vmatpush.bf16.msra.mxu0 %v393
  %531 = vmatpush.bf16.msra.mxu0 %v388
  %532 = vmatmul.bf16.gmra.mxu0 %v485
  %v533 = vpop.f32.mrf.mxu0
  %v534 = vadd.f32 %v516, %v533
  %v535 = vpop.f32.mrf.mxu0
  %v536 = vadd.f32 %v518, %v535
  %537 = vmatmul.bf16.gmra.mxu0 %v488
  %v538 = vpop.f32.mrf.mxu0
  %v539 = vadd.f32 %v521, %v538
  %v540 = vpop.f32.mrf.mxu0
  %541 = vdwg.mxu0
  %542 = vmatpush.bf16.msra.mxu0 %v384
  %543 = vmatpush.bf16.msra.mxu0 %v379
  %544 = vmatpush.bf16.msra.mxu0 %v374
  %545 = vmatpush.bf16.msra.mxu0 %v369
  %546 = vmatpush.bf16.msra.mxu0 %v364
  %547 = vmatpush.bf16.msra.mxu0 %v359
  %548 = vmatpush.bf16.msra.mxu0 %v354
  %549 = vmatpush.bf16.msra.mxu0 %v349
  %550 = vmatmul.bf16.gmra.mxu0 %v126
  %v551 = vpop.f32.mrf.mxu0
  %v552 = vadd.f32 %v105, %v551
  %v553 = vpop.f32.mrf.mxu0
  %v554 = vadd.f32 %v110, %v553
  %555 = vmatmul.bf16.gmra.mxu0 %v128
  %v556 = vpop.f32.mrf.mxu0
  %v557 = vadd.f32 %v115, %v556
  %v558 = vpop.f32.mrf.mxu0
  %559 = vdwg.mxu0
  %560 = vmatpush.bf16.msra.mxu0 0
  %561 = vmatpush.bf16.msra.mxu0 0
  %562 = vmatpush.bf16.msra.mxu0 %v495
  %563 = vmatpush.bf16.msra.mxu0 %v409
  %564 = vmatpush.bf16.msra.mxu0 %v404
  %565 = vmatpush.bf16.msra.mxu0 %v399
  %566 = vmatpush.bf16.msra.mxu0 %v394
  %567 = vmatpush.bf16.msra.mxu0 %v389
  %568 = vmatmul.bf16.gmra.mxu0 %v485
  %v569 = vpop.f32.mrf.mxu0
  %v570 = vadd.f32 %v552, %v569
  %v571 = vpop.f32.mrf.mxu0
  %v572 = vadd.f32 %v554, %v571
  %573 = vmatmul.bf16.gmra.mxu0 %v488
  %v574 = vpop.f32.mrf.mxu0
  %v575 = vadd.f32 %v557, %v574
  %v576 = vpop.f32.mrf.mxu0
  %577 = vdwg.mxu0
  %578 = vmatpush.bf16.msra.mxu0 %v385
  %579 = vmatpush.bf16.msra.mxu0 %v380
  %580 = vmatpush.bf16.msra.mxu0 %v375
  %581 = vmatpush.bf16.msra.mxu0 %v370
  %582 = vmatpush.bf16.msra.mxu0 %v365
  %583 = vmatpush.bf16.msra.mxu0 %v360
  %584 = vmatpush.bf16.msra.mxu0 %v355
  %585 = vmatpush.bf16.msra.mxu0 %v350
  %586 = vmatmul.bf16.gmra.mxu0 %v126
  %v587 = vpop.f32.mrf.mxu0
  %v588 = vadd.f32 %v105, %v587
  %v589 = vpop.f32.mrf.mxu0
  %v590 = vadd.f32 %v110, %v589
  %591 = vmatmul.bf16.gmra.mxu0 %v128
  %v592 = vpop.f32.mrf.mxu0
  %v593 = vadd.f32 %v115, %v592
  %v594 = vpop.f32.mrf.mxu0
  %595 = vdwg.mxu0
  %596 = vmatpush.bf16.msra.mxu0 0
  %597 = vmatpush.bf16.msra.mxu0 0
  %598 = vmatpush.bf16.msra.mxu0 %v498
  %599 = vmatpush.bf16.msra.mxu0 %v410
  %600 = vmatpush.bf16.msra.mxu0 %v405
  %601 = vmatpush.bf16.msra.mxu0 %v400
  %602 = vmatpush.bf16.msra.mxu0 %v395
  %603 = vmatpush.bf16.msra.mxu0 %v390
  %604 = vmatmul.bf16.gmra.mxu0 %v485
  %v605 = vpop.f32.mrf.mxu0
  %v606 = vadd.f32 %v588, %v605
  %v607 = vpop.f32.mrf.mxu0
  %v608 = vadd.f32 %v590, %v607
  %609 = vmatmul.bf16.gmra.mxu0 %v488
  %v610 = vpop.f32.mrf.mxu0
  %v611 = vadd.f32 %v593, %v610
  %v612 = vpop.f32.mrf.mxu0
  %613 = vdwg.mxu0
  %614 = vmatpush.bf16.msra.mxu0 %v386
  %615 = vmatpush.bf16.msra.mxu0 %v381
  %616 = vmatpush.bf16.msra.mxu0 %v376
  %617 = vmatpush.bf16.msra.mxu0 %v371
  %618 = vmatpush.bf16.msra.mxu0 %v366
  %619 = vmatpush.bf16.msra.mxu0 %v361
  %620 = vmatpush.bf16.msra.mxu0 %v356
  %621 = vmatpush.bf16.msra.mxu0 %v351
  %622 = vmatmul.bf16.gmra.mxu0 %v126
  %v623 = vpop.f32.mrf.mxu0
  %v624 = vadd.f32 %v105, %v623
  %v625 = vpop.f32.mrf.mxu0
  %v626 = vadd.f32 %v110, %v625
  %627 = vmatmul.bf16.gmra.mxu0 %v128
  %v628 = vpop.f32.mrf.mxu0
  %v629 = vadd.f32 %v115, %v628
  %v630 = vpop.f32.mrf.mxu0
  %631 = vdwg.mxu0
  %632 = vmatpush.bf16.msra.mxu0 0
  %633 = vmatpush.bf16.msra.mxu0 0
  %634 = vmatpush.bf16.msra.mxu0 %v501
  %635 = vmatpush.bf16.msra.mxu0 %v411
  %636 = vmatpush.bf16.msra.mxu0 %v406
  %637 = vmatpush.bf16.msra.mxu0 %v401
  %638 = vmatpush.bf16.msra.mxu0 %v396
  %639 = vmatpush.bf16.msra.mxu0 %v391
  %640 = vmatmul.bf16.gmra.mxu0 %v485
  %v641 = vpop.f32.mrf.mxu0
  %v642 = vadd.f32 %v624, %v641
  %v643 = vpop.f32.mrf.mxu0
  %v644 = vadd.f32 %v626, %v643
  %645 = vmatmul.bf16.gmra.mxu0 %v488
  %v646 = vpop.f32.mrf.mxu0
  %v647 = vadd.f32 %v629, %v646
  %v648 = vpop.f32.mrf.mxu0
  %649 = vdwg.mxu0
  %650 = vmatpush.bf16.msra.mxu0 %v387
  %651 = vmatpush.bf16.msra.mxu0 %v382
  %652 = vmatpush.bf16.msra.mxu0 %v377
  %653 = vmatpush.bf16.msra.mxu0 %v372
  %654 = vmatpush.bf16.msra.mxu0 %v367
  %655 = vmatpush.bf16.msra.mxu0 %v362
  %656 = vmatpush.bf16.msra.mxu0 %v357
  %657 = vmatpush.bf16.msra.mxu0 %v352
  %658 = vmatmul.bf16.gmra.mxu0 %v126
  %v659 = vpop.f32.mrf.mxu0
  %v660 = vadd.f32 %v105, %v659
  %v661 = vpop.f32.mrf.mxu0
  %v662 = vadd.f32 %v110, %v661
  %663 = vmatmul.bf16.gmra.mxu0 %v128
  %v664 = vpop.f32.mrf.mxu0
  %v665 = vadd.f32 %v115, %v664
  %v666 = vpop.f32.mrf.mxu0
  %667 = vdwg.mxu0
  %668 = vmatpush.bf16.msra.mxu0 0
  %669 = vmatpush.bf16.msra.mxu0 0
  %670 = vmatpush.bf16.msra.mxu0 %v504
  %671 = vmatpush.bf16.msra.mxu0 %v412
  %672 = vmatpush.bf16.msra.mxu0 %v407
  %673 = vmatpush.bf16.msra.mxu0 %v402
  %674 = vmatpush.bf16.msra.mxu0 %v397
  %675 = vmatpush.bf16.msra.mxu0 %v392
  %676 = vmatmul.bf16.gmra.mxu0 %v485
  %v677 = vpop.f32.mrf.mxu0
  %v678 = vadd.f32 %v660, %v677
  %v679 = vpop.f32.mrf.mxu0
  %v680 = vadd.f32 %v662, %v679
  %681 = vmatmul.bf16.gmra.mxu0 %v488
  %v682 = vpop.f32.mrf.mxu0
  %v683 = vadd.f32 %v665, %v682
  %v684 = vpop.f32.mrf.mxu0
  %685 = vdwg.mxu0
  %686 = vst [vmem:[%s3] sm:$0xff] %v534
  %687 = vst [vmem:[%s3 + $0x8] sm:$0xff] %v570
  %688 = vst [vmem:[%s3 + $0x10] sm:$0xff] %v606
  %689 = vst [vmem:[%s3 + $0x18] sm:$0xff] %v642
  %690 = vst [vmem:[%s3 + $0x20] sm:$0xff] %v678
  %691 = vst [vmem:[%s3 + $0x28] sm:$0xff] %v536
  %692 = vst [vmem:[%s3 + $0x30] sm:$0xff] %v572
  %693 = vst [vmem:[%s3 + $0x38] sm:$0xff] %v608
  %694 = vst [vmem:[%s3 + $0x40] sm:$0xff] %v644
  %695 = vst [vmem:[%s3 + $0x48] sm:$0xff] %v680
  %696 = vst [vmem:[%s3 + $0x50] sm:$0x7] %v539
  %697 = vst [vmem:[%s3 + $0x58] sm:$0x7] %v575
  %698 = vst [vmem:[%s3 + $0x60] sm:$0x7] %v611
  %699 = vst [vmem:[%s3 + $0x68] sm:$0x7] %v647
  %700 = vst [vmem:[%s3 + $0x70] sm:$0x7] %v683
  // Predicated region
  $region14: #{a_call__.1} parent=0 // pred_check
    _
  $region15: #{a_call__.1} parent=0 // pred_check_branch
    %702 = sbr.rel (0) target = $region17
  $region16: #{a_call__.1} parent=0 // pred_region
    _
  $region17: #{a_call__.1} parent=0 // pred_fallthru
    _
  // Predicated region
  $region18: #{a_call__.1} parent=0 // pred_check
    _
  $region19: #{a_call__.1} parent=0 // pred_check_branch
    %704 = sbr.rel (0) target = $region21
  $region20: #{a_call__.1} parent=0 // pred_region
    _
  $region21: #{a_call__.1} parent=0 // pred_fallthru
    _

</llo_original>
